<compile_context>
chip_gen: v5e
topology: v5e:2x2
jax: 0.10.0
libtpu: 0.0.40
codegen_flags: <defaults>
</compile_context>

<pallas_src>
import functools
import math

import jax
import jax.numpy as jnp
from jax.experimental import pallas as pl
from jax.experimental.pallas import tpu as pltpu

LOG2 = 0.6931471805599453
LOG_SQRT_2PI = 0.5 * math.log(2.0 * math.pi)

LANE = 128
SUBLANE = 8
MAX_BATCH_TILE = 512


def _round_up(n, m):
    return ((n + m - 1) // m) * m


def _actor_kernel(*refs, n_layers, n_act, with_logprob, compute_dtype):
    """refs = (obs, [W_i, b_i] * n_layers, W_head, b_head, eps,
               action_out[, logp_out]).

    All feature dims are padded to 128 lanes; padded weight rows/cols and
    biases are zero, so padded activation lanes stay exactly zero through the
    trunk and the head (mu = 0, log_std = 0 -> std = 1, eps = 0 -> action = 0).
    The log-prob reduction masks the padded action lanes explicitly.
    """
    x = refs[0][...].astype(compute_dtype)
    idx = 1

    # Hidden trunk: Linear + ReLU, repeated n_layers times (weights resident).
    for _ in range(n_layers):
        w = refs[idx][...]
        b = refs[idx + 1][...]
        idx += 2
        h = jnp.dot(x, w, preferred_element_type=jnp.float32) + b
        x = jnp.maximum(h, 0.0).astype(compute_dtype)

    w_head = refs[idx][...]
    b_head = refs[idx + 1][...]
    eps = refs[idx + 2][...]
    action_ref = refs[idx + 3]

    # Fused mu || log_std head: single MXU pass, lane-dense (2 * act_pad wide).
    head = jnp.dot(x, w_head, preferred_element_type=jnp.float32) + b_head
    act_pad = head.shape[-1] // 2
    mu = head[:, :act_pad]
    log_std = jnp.clip(head[:, act_pad:], -20.0, 2.0)
    std = jnp.exp(log_std)

    # rsample: action = mu + eps * std  (eps == 0 -> deterministic == mu).
    action = mu + eps * std
    action_ref[...] = jnp.tanh(action)

    if with_logprob:
        logp_ref = refs[idx + 4]
        # Normal(mu, std).log_prob(action) with z = (action - mu)/std == eps
        # (exact algebra, no divide).
        logp_elem = -0.5 * eps * eps - log_std - LOG_SQRT_2PI
        # tanh-squash correction: 2*(LOG2 - a - softplus(-2a)), stable softplus.
        t = -2.0 * action
        softplus_t = jnp.maximum(t, 0.0) + jnp.log1p(jnp.exp(-jnp.abs(t)))
        corr = 2.0 * (LOG2 - action - softplus_t)
        # Single cross-lane reduction; mask padded action lanes.
        lane = jax.lax.broadcasted_iota(jnp.int32, logp_elem.shape, 1)
        contrib = jnp.where(lane < n_act, logp_elem - corr, 0.0)
        logp = jnp.sum(contrib, axis=-1, keepdims=True)
        # Lane-dense store (width 128); column 0 holds the real value.
        logp_ref[...] = jnp.broadcast_to(logp, logp_ref.shape)


class MLPActorPallas:
    """Pallas re-implementation of MLPActor.

    Mirrors the PyTorch module exactly: the trunk uses hidden[:-1] layers
    (each Linear + ReLU); mu_layer and log_std_layer map the last trunk width
    to n_act (implemented as one fused head matmul).
    """

    def __init__(self, n_obs, n_act, hidden, key, compute_dtype=jnp.float32):
        # compute_dtype=jnp.bfloat16 halves weight/activation bytes and doubles
        # MXU rate on v6e/v7x; f32 default keeps bit-tight parity with the
        # reference for verification.
        self.n_obs = n_obs
        self.n_act = n_act
        self.hidden = tuple(hidden)
        self.compute_dtype = compute_dtype

        self.n_obs_pad = _round_up(n_obs, LANE)
        self.act_pad = _round_up(n_act, LANE)

        def linear_init(key, fan_in, fan_out):
            # PyTorch nn.Linear default init: U(-1/sqrt(fan_in), 1/sqrt(fan_in))
            kw, kb = jax.random.split(key)
            bound = 1.0 / math.sqrt(fan_in)
            w = jax.random.uniform(kw, (fan_in, fan_out), jnp.float32, -bound, bound)
            b = jax.random.uniform(kb, (1, fan_out), jnp.float32, -bound, bound)
            return w, b

        def pad2d(x, rows, cols, dtype):
            out = jnp.zeros((rows, cols), dtype)
            return out.at[: x.shape[0], : x.shape[1]].set(x.astype(dtype))

        trunk_widths = self.hidden[:-1]
        keys = jax.random.split(key, len(trunk_widths) + 2)

        # Unpadded f32 params (reference math).
        self.net_params = []
        n_input = n_obs
        for i, n_output in enumerate(trunk_widths):
            self.net_params.append(linear_init(keys[i], n_input, n_output))
            n_input = n_output
        self.mu_params = linear_init(keys[-2], n_input, n_act)
        self.log_std_params = linear_init(keys[-1], n_input, n_act)

        # Padded, lane-dense kernel params (weights: compute_dtype, biases: f32).
        self.net_params_pad = []
        in_pad = self.n_obs_pad
        for (w, b), n_output in zip(self.net_params, trunk_widths):
            out_pad = _round_up(n_output, LANE)
            self.net_params_pad.append(
                (pad2d(w, in_pad, out_pad, compute_dtype),
                 pad2d(b, 1, out_pad, jnp.float32)))
            in_pad = out_pad
        self.last_pad = in_pad

        # Fused mu || log_std head.
        w_head = jnp.zeros((in_pad, 2 * self.act_pad), compute_dtype)
        w_head = w_head.at[:n_input, :n_act].set(self.mu_params[0].astype(compute_dtype))
        w_head = w_head.at[:n_input, self.act_pad:self.act_pad + n_act].set(
            self.log_std_params[0].astype(compute_dtype))
        b_head = jnp.zeros((1, 2 * self.act_pad), jnp.float32)
        b_head = b_head.at[:, :n_act].set(self.mu_params[1])
        b_head = b_head.at[:, self.act_pad:self.act_pad + n_act].set(self.log_std_params[1])
        self.head_params_pad = (w_head, b_head)

    def __call__(self, obs, deterministic=False, with_logprob=False, key=None):
        batch = obs.shape[0]
        if deterministic:
            eps = jnp.zeros((batch, self.n_act), jnp.float32)
        else:
            assert key is not None, "stochastic sampling requires a PRNG key"
            eps = jax.random.normal(key, (batch, self.n_act), jnp.float32)
        # TODO(synk): eps could be drawn in-kernel (pltpu.prng_seed + stateful_normal)
        # to drop one HBM input stream; kept external so the reference sees identical noise.

        tb = min(MAX_BATCH_TILE, _round_up(batch, SUBLANE))
        batch_pad = _round_up(batch, tb)
        grid = (batch_pad // tb,)

        obs_p = jnp.zeros((batch_pad, self.n_obs_pad), jnp.float32)
        obs_p = obs_p.at[:batch, :self.n_obs].set(obs.astype(jnp.float32))
        eps_p = jnp.zeros((batch_pad, self.act_pad), jnp.float32)
        eps_p = eps_p.at[:batch, :self.n_act].set(eps)

        inputs = [obs_p]
        in_specs = [pl.BlockSpec((tb, self.n_obs_pad), lambda i: (i, 0))]
        for w, b in self.net_params_pad:
            inputs += [w, b]
            in_specs += [pl.BlockSpec(w.shape, lambda i: (0, 0)),
                         pl.BlockSpec(b.shape, lambda i: (0, 0))]
        w_head, b_head = self.head_params_pad
        inputs += [w_head, b_head, eps_p]
        in_specs += [pl.BlockSpec(w_head.shape, lambda i: (0, 0)),
                     pl.BlockSpec(b_head.shape, lambda i: (0, 0)),
                     pl.BlockSpec((tb, self.act_pad), lambda i: (i, 0))]

        if with_logprob:
            out_shape = (jax.ShapeDtypeStruct((batch_pad, self.act_pad), jnp.float32),
                         jax.ShapeDtypeStruct((batch_pad, LANE), jnp.float32))
            out_specs = (pl.BlockSpec((tb, self.act_pad), lambda i: (i, 0)),
                         pl.BlockSpec((tb, LANE), lambda i: (i, 0)))
        else:
            out_shape = jax.ShapeDtypeStruct((batch_pad, self.act_pad), jnp.float32)
            out_specs = pl.BlockSpec((tb, self.act_pad), lambda i: (i, 0))

        flops = 2 * batch_pad * (
            sum(w.shape[0] * w.shape[1] for w, _ in self.net_params_pad)
            + w_head.shape[0] * w_head.shape[1])
        transcendentals = batch_pad * self.act_pad * (5 if with_logprob else 2)
        bytes_accessed = sum(int(x.size) * x.dtype.itemsize for x in inputs)
        bytes_accessed += batch_pad * (self.act_pad + (LANE if with_logprob else 0)) * 4

        kernel = functools.partial(
            _actor_kernel,
            n_layers=len(self.net_params_pad),
            n_act=self.n_act,
            with_logprob=with_logprob,
            compute_dtype=self.compute_dtype)

        result = pl.pallas_call(
            kernel,
            grid=grid,
            in_specs=in_specs,
            out_specs=out_specs,
            out_shape=out_shape,
            compiler_params=pltpu.CompilerParams(
                dimension_semantics=("parallel",),
                vmem_limit_bytes=32 * 1024 * 1024),
            cost_estimate=pl.CostEstimate(
                flops=int(flops),
                transcendentals=int(transcendentals),
                bytes_accessed=int(bytes_accessed)),
        )(*inputs)

        if with_logprob:
            action_p, logp_p = result
            return action_p[:batch, :self.n_act], logp_p[:batch, 0]
        return result[:batch, :self.n_act], None


def _reference_forward(actor, obs, eps):
    """Pure-JAX reference with identical math, for verification."""
    x = obs
    for w, b in actor.net_params:
        x = jnp.maximum(x @ w + b, 0.0)
    mu = x @ actor.mu_params[0] + actor.mu_params[1]
    log_std = jnp.clip(x @ actor.log_std_params[0] + actor.log_std_params[1], -20.0, 2.0)
    std = jnp.exp(log_std)
    action = mu + eps * std
    z = (action - mu) / std
    logp = jnp.sum(-0.5 * z * z - log_std - LOG_SQRT_2PI, axis=-1)
    logp -= jnp.sum(2.0 * (LOG2 - action - jax.nn.softplus(-2.0 * action)), axis=-1)
    return jnp.tanh(action), logp


if __name__ == "__main__":
    # Small shapes consistent with the module.
    batch, n_obs, n_act = 2, 16, 8
    hidden = (32, 32)   # trunk uses hidden[:-1] == (32,), exactly like the PyTorch code

    key = jax.random.PRNGKey(0)
    k_param, k_obs, k_eps = jax.random.split(key, 3)

    actor = MLPActorPallas(n_obs, n_act, hidden, k_param)
    obs = jax.random.normal(k_obs, (batch, n_obs), jnp.float32)

    # Stochastic path with log-prob.
    action, logp = actor(obs, deterministic=False, with_logprob=True, key=k_eps)
    action = jax.block_until_ready(action)
    logp = jax.block_until_ready(logp)

    # Deterministic path, no log-prob (compiles the tail-free kernel variant).
    action_det, logp_none = actor(obs, deterministic=True, with_logprob=False)
    action_det = jax.block_until_ready(action_det)
    assert logp_none is None

    # Verify against pure-JAX reference.
    eps = jax.random.normal(k_eps, (batch, n_act), jnp.float32)
    ref_action, ref_logp = _reference_forward(actor, obs, eps)
    assert jnp.allclose(action, ref_action, atol=1e-5, rtol=1e-5)
    assert jnp.allclose(logp, ref_logp, atol=1e-4, rtol=1e-4)
    ref_action_det, _ = _reference_forward(actor, obs, jnp.zeros_like(eps))
    assert jnp.allclose(action_det, ref_action_det, atol=1e-5, rtol=1e-5)

    print("KERNEL_OK")
</pallas_src>

<mosaic_0001>
module attributes {stable_mosaic.version = 11 : i64} {
  func.func @_actor_kernel(%arg0: i32, %arg1: memref<8x128xf32, #tpu.memory_space<vmem>>, %arg2: memref<128x128xf32, #tpu.memory_space<vmem>>, %arg3: memref<1x128xf32, #tpu.memory_space<vmem>>, %arg4: memref<128x256xf32, #tpu.memory_space<vmem>>, %arg5: memref<1x256xf32, #tpu.memory_space<vmem>>, %arg6: memref<8x128xf32, #tpu.memory_space<vmem>>, %arg7: memref<8x128xf32, #tpu.memory_space<vmem>>, %arg8: memref<8x128xf32, #tpu.memory_space<vmem>>) attributes {dimension_semantics = [#tpu.dimension_semantics<parallel>], iteration_bounds = array<i64: 1>, scalar_prefetch = 0 : i64, scratch_operands = 0 : i64, tpu.core_type = #tpu.core_type<tc>, window_params = [{transform_indices = @transform_0, window_bounds = array<i64: 8, 128>}, {pipeline_mode = #tpu.pipeline_mode<synchronous>, transform_indices = @transform_1, window_bounds = array<i64: 128, 128>}, {pipeline_mode = #tpu.pipeline_mode<synchronous>, transform_indices = @transform_2, window_bounds = array<i64: 1, 128>}, {pipeline_mode = #tpu.pipeline_mode<synchronous>, transform_indices = @transform_3, window_bounds = array<i64: 128, 256>}, {pipeline_mode = #tpu.pipeline_mode<synchronous>, transform_indices = @transform_4, window_bounds = array<i64: 1, 256>}, {transform_indices = @transform_5, window_bounds = array<i64: 8, 128>}, {transform_indices = @transform_6, window_bounds = array<i64: 8, 128>}, {transform_indices = @transform_7, window_bounds = array<i64: 8, 128>}]} {
    %c0 = arith.constant 0 : index
    %c0_0 = arith.constant 0 : index
    %0 = vector.load %arg1[%c0, %c0_0] : memref<8x128xf32, #tpu.memory_space<vmem>>, vector<8x128xf32>
    %c0_1 = arith.constant 0 : index
    %c0_2 = arith.constant 0 : index
    %1 = vector.load %arg2[%c0_1, %c0_2] : memref<128x128xf32, #tpu.memory_space<vmem>>, vector<128x128xf32>
    %c0_3 = arith.constant 0 : index
    %c0_4 = arith.constant 0 : index
    %2 = vector.load %arg3[%c0_3, %c0_4] : memref<1x128xf32, #tpu.memory_space<vmem>>, vector<1x128xf32>
    %cst = arith.constant dense<0.000000e+00> : vector<8x128xf32>
    %3 = tpu.matmul %0, %1, %cst {dimension_numbers = #tpu.dot_dimension_numbers<[1], [0], [0], [1], [0, 0, 1, 1], [], []>} : vector<8x128xf32>, vector<128x128xf32>, vector<8x128xf32> -> vector<8x128xf32>
    %4 = vector.broadcast %2 : vector<1x128xf32> to vector<8x128xf32>
    %5 = arith.addf %3, %4 : vector<8x128xf32>
    %cst_5 = arith.constant 0.000000e+00 : f32
    %6 = vector.broadcast %cst_5 : f32 to vector<8x128xf32>
    %7 = arith.maximumf %5, %6 : vector<8x128xf32>
    %c0_6 = arith.constant 0 : index
    %c0_7 = arith.constant 0 : index
    %8 = vector.load %arg4[%c0_6, %c0_7] : memref<128x256xf32, #tpu.memory_space<vmem>>, vector<128x256xf32>
    %c0_8 = arith.constant 0 : index
    %c0_9 = arith.constant 0 : index
    %9 = vector.load %arg5[%c0_8, %c0_9] : memref<1x256xf32, #tpu.memory_space<vmem>>, vector<1x256xf32>
    %c0_10 = arith.constant 0 : index
    %c0_11 = arith.constant 0 : index
    %10 = vector.load %arg6[%c0_10, %c0_11] : memref<8x128xf32, #tpu.memory_space<vmem>>, vector<8x128xf32>
    %cst_12 = arith.constant dense<0.000000e+00> : vector<8x256xf32>
    %11 = tpu.matmul %7, %8, %cst_12 {dimension_numbers = #tpu.dot_dimension_numbers<[1], [0], [0], [1], [0, 0, 1, 1], [], []>} : vector<8x128xf32>, vector<128x256xf32>, vector<8x256xf32> -> vector<8x256xf32>
    %12 = vector.broadcast %9 : vector<1x256xf32> to vector<8x256xf32>
    %13 = arith.addf %11, %12 : vector<8x256xf32>
    %14 = vector.extract_strided_slice %13 {offsets = [0, 0], sizes = [8, 128], strides = [1, 1]} : vector<8x256xf32> to vector<8x128xf32>
    %15 = vector.extract_strided_slice %13 {offsets = [0, 128], sizes = [8, 128], strides = [1, 1]} : vector<8x256xf32> to vector<8x128xf32>
    %cst_13 = arith.constant -2.000000e+01 : f32
    %cst_14 = arith.constant 2.000000e+00 : f32
    %16 = vector.broadcast %cst_13 : f32 to vector<8x128xf32>
    %17 = arith.maximumf %16, %15 : vector<8x128xf32>
    %18 = vector.broadcast %cst_14 : f32 to vector<8x128xf32>
    %19 = arith.minimumf %18, %17 : vector<8x128xf32>
    %20 = math.exp %19 : vector<8x128xf32>
    %21 = arith.mulf %10, %20 : vector<8x128xf32>
    %22 = arith.addf %14, %21 : vector<8x128xf32>
    %23 = math.tanh %22 : vector<8x128xf32>
    %c0_15 = arith.constant 0 : index
    %c0_16 = arith.constant 0 : index
    %24 = vector.load %arg7[%c0_15, %c0_16] : memref<8x128xf32, #tpu.memory_space<vmem>>, vector<8x128xf32>
    tpu.vector_store %arg7[%c0_15, %c0_16], %23 {strides = array<i32>} : memref<8x128xf32, #tpu.memory_space<vmem>>, vector<8x128xf32>,
    %cst_17 = arith.constant -5.000000e-01 : f32
    %25 = vector.broadcast %cst_17 : f32 to vector<8x128xf32>
    %26 = arith.mulf %25, %10 : vector<8x128xf32>
    %27 = arith.mulf %26, %10 : vector<8x128xf32>
    %28 = arith.subf %27, %19 : vector<8x128xf32>
    %cst_18 = arith.constant 0.918938517 : f32
    %29 = vector.broadcast %cst_18 : f32 to vector<8x128xf32>
    %30 = arith.subf %28, %29 : vector<8x128xf32>
    %cst_19 = arith.constant -2.000000e+00 : f32
    %31 = vector.broadcast %cst_19 : f32 to vector<8x128xf32>
    %32 = arith.mulf %31, %22 : vector<8x128xf32>
    %cst_20 = arith.constant 0.000000e+00 : f32
    %33 = vector.broadcast %cst_20 : f32 to vector<8x128xf32>
    %34 = arith.maximumf %32, %33 : vector<8x128xf32>
    %35 = math.absf %32 : vector<8x128xf32>
    %cst_21 = arith.constant 0.000000e+00 : f32
    %36 = vector.broadcast %cst_21 : f32 to vector<8x128xf32>
    %37 = arith.subf %36, %35 : vector<8x128xf32>
    %38 = math.exp %37 : vector<8x128xf32>
    %39 = math.log1p %38 : vector<8x128xf32>
    %40 = arith.addf %34, %39 : vector<8x128xf32>
    %cst_22 = arith.constant 0.693147182 : f32
    %41 = vector.broadcast %cst_22 : f32 to vector<8x128xf32>
    %42 = arith.subf %41, %22 : vector<8x128xf32>
    %43 = arith.subf %42, %40 : vector<8x128xf32>
    %cst_23 = arith.constant 2.000000e+00 : f32
    %44 = vector.broadcast %cst_23 : f32 to vector<8x128xf32>
    %45 = arith.mulf %44, %43 : vector<8x128xf32>
    %46 = tpu.iota {dimensions = array<i32: 1>} : vector<8x128xi32>
    %c8_i32 = arith.constant 8 : i32
    %47 = vector.broadcast %c8_i32 : i32 to vector<8x128xi32>
    %48 = arith.cmpi slt, %46, %47 : vector<8x128xi32>
    %49 = arith.subf %30, %45 : vector<8x128xf32>
    %cst_24 = arith.constant 0.000000e+00 : f32
    %50 = vector.broadcast %cst_24 : f32 to vector<8x128xf32>
    %51 = arith.select %48, %49, %50 : vector<8x128xi1>, vector<8x128xf32>
    %cst_25 = arith.constant dense<0.000000e+00> : vector<8xf32>
    %52 = vector.multi_reduction <add>, %51, %cst_25 [1] : vector<8x128xf32> to vector<8xf32>
    %53 = vector.shape_cast %52 : vector<8xf32> to vector<8x1xf32>
    %54 = vector.shape_cast %53 : vector<8x1xf32> to vector<8x1xf32>
    %55 = vector.broadcast %54 : vector<8x1xf32> to vector<8x128xf32>
    %c0_26 = arith.constant 0 : index
    %c0_27 = arith.constant 0 : index
    %56 = vector.load %arg8[%c0_26, %c0_27] : memref<8x128xf32, #tpu.memory_space<vmem>>, vector<8x128xf32>
    tpu.vector_store %arg8[%c0_26, %c0_27], %55 {strides = array<i32>} : memref<8x128xf32, #tpu.memory_space<vmem>>, vector<8x128xf32>,
    return
  }
  func.func @transform_0(%arg0: i32) -> (i32, i32) {
    %c0_i32 = arith.constant 0 : i32
    %c0_i32_0 = arith.constant 0 : i32
    return %arg0, %c0_i32 : i32, i32
  }
  func.func @transform_1(%arg0: i32) -> (i32, i32) {
    %c0_i32 = arith.constant 0 : i32
    %c0_i32_0 = arith.constant 0 : i32
    %c0_i32_1 = arith.constant 0 : i32
    return %c0_i32, %c0_i32_0 : i32, i32
  }
  func.func @transform_2(%arg0: i32) -> (i32, i32) {
    %c0_i32 = arith.constant 0 : i32
    %c0_i32_0 = arith.constant 0 : i32
    %c0_i32_1 = arith.constant 0 : i32
    return %c0_i32, %c0_i32_0 : i32, i32
  }
  func.func @transform_3(%arg0: i32) -> (i32, i32) {
    %c0_i32 = arith.constant 0 : i32
    %c0_i32_0 = arith.constant 0 : i32
    %c0_i32_1 = arith.constant 0 : i32
    return %c0_i32, %c0_i32_0 : i32, i32
  }
  func.func @transform_4(%arg0: i32) -> (i32, i32) {
    %c0_i32 = arith.constant 0 : i32
    %c0_i32_0 = arith.constant 0 : i32
    %c0_i32_1 = arith.constant 0 : i32
    return %c0_i32, %c0_i32_0 : i32, i32
  }
  func.func @transform_5(%arg0: i32) -> (i32, i32) {
    %c0_i32 = arith.constant 0 : i32
    %c0_i32_0 = arith.constant 0 : i32
    return %arg0, %c0_i32 : i32, i32
  }
  func.func @transform_6(%arg0: i32) -> (i32, i32) {
    %c0_i32 = arith.constant 0 : i32
    %c0_i32_0 = arith.constant 0 : i32
    return %arg0, %c0_i32 : i32, i32
  }
  func.func @transform_7(%arg0: i32) -> (i32, i32) {
    %c0_i32 = arith.constant 0 : i32
    %c0_i32_0 = arith.constant 0 : i32
    return %arg0, %c0_i32 : i32, i32
  }
}

</mosaic_0001>

<llo_original>
// kernel: tpu_custom_call.1
$region0: #{tpu_custom_call.1}
  #allocation0 [shape = 'u32[]', space=smem, size = 0x4, offset = 0x4, fixed_abs, tag = 'smem constant byte address 0x4 - core index']
  #allocation1 [shape = 'u32[72,128]{1,0:T(1,128)}', space=vmem, size = 0x9000, scoped, tag = 'internal scratch']
  %s0 = inlined_call_operand.hbm [shape: f32[8,128], index: 0, kind: input, shape index: {}]
  %s1 = inlined_call_operand.hbm [shape: f32[128,128], index: 1, kind: input, shape index: {}]
  %s2 = inlined_call_operand.vmem [shape: f32[1,128], index: 2, kind: input, shape index: {}]
  %s3 = inlined_call_operand.hbm [shape: f32[128,256], index: 3, kind: input, shape index: {}]
  %s4 = inlined_call_operand.vmem [shape: f32[1,256], index: 4, kind: input, shape index: {}]
  %s5 = inlined_call_operand.hbm [shape: f32[8,128], index: 5, kind: input, shape index: {}]
  %s6 = inlined_call_operand.hbm [shape: f32[8,128], index: 6, kind: output, shape index: {0}]
  %s7 = inlined_call_operand.hbm [shape: f32[8,128], index: 7, kind: output, shape index: {1}]
  %8 = xla_tuple %s6, %s7
  %s9 = sld [smem:[#allocation0]]
  $region58: #{tpu_custom_call.1} parent=0
    _
  %s11 = ssub.s32 1, %s9
  %s12 = scalar_select 0, %s11, %s9
  $region1: #{tpu_custom_call.1} parent=0
    #allocation2 [shape = 'u8[4096]{0}', space=vmem, size = 0x1000, scoped, tag = 'input window, operand 0, single buffered']
    #allocation3 [shape = 's32[1]{0}', space=sflag, size = 0x4, scoped, tag = 'scoped memory for tpu_custom_call.1']
    #allocation4 [shape = 's32[1]{0}', space=sflag, size = 0x4, scoped, tag = 'scoped memory for tpu_custom_call.1']
    #allocation5 [shape = 'u8[65536]{0}', space=vmem, size = 0x10000, scoped, tag = 'input window, operand 1, single buffered']
    #allocation6 [shape = 's32[1]{0}', space=sflag, size = 0x4, scoped, tag = 'scoped memory for tpu_custom_call.1']
    #allocation7 [shape = 'u8[131072]{0}', space=vmem, size = 0x20000, scoped, tag = 'input window, operand 3, single buffered']
    #allocation8 [shape = 'u8[4096]{0}', space=vmem, size = 0x1000, scoped, tag = 'input window, operand 5, single buffered']
    #allocation9 [shape = 's32[1]{0}', space=sflag, size = 0x4, scoped, tag = 'scoped memory for tpu_custom_call.1']
    #allocation10 [shape = 'u8[4096]{0}', space=vmem, size = 0x1000, scoped, tag = 'output window, operand 0, single buffered']
    #allocation11 [shape = 'u8[4096]{0}', space=vmem, size = 0x1000, scoped, tag = 'output window, operand 1, single buffered']
    #allocation12 [shape = 's32[1]{0}', space=sflag, size = 0x4, scoped, tag = 'scoped memory for tpu_custom_call.1']
    %13 = vsyncpa [#allocation3], 0
    %14 = vsyncpa [#allocation6], 0
    %15 = vsyncpa [#allocation9], 0
    %16 = vsyncpa [#allocation4], 0
    %17 = vsyncpa [#allocation12], 0
    // Predicated region
    $region2: #{tpu_custom_call.1} parent=1 // pred_check
      _
    $region3: #{tpu_custom_call.1} parent=1 // pred_check_branch
      %19 = sbr.rel (0) target = $region5
    $region4: #{tpu_custom_call.1} parent=1 // pred_region
      %21 = vsyncadd [#allocation3], 0
      %s23 = sshll.u32 %s0, 4
      %s24 = int_to_ptr.hbm [resolvable:$true] %s23
      %s25 = sshll.u32 [#allocation2], 4
      %s26 = int_to_ptr.vmem [resolvable:$true] %s25
      %28 = dma.hbm_to_vmem [thread:$0]  %s24, 128, %s26, [#allocation3]
    $region5: #{tpu_custom_call.1} parent=1 // pred_fallthru
      _
    // Predicated region
    $region6: #{tpu_custom_call.1} parent=1 // pred_check
      _
    $region7: #{tpu_custom_call.1} parent=1 // pred_check_branch
      %30 = sbr.rel (0) target = $region9
    $region8: #{tpu_custom_call.1} parent=1 // pred_region
      %32 = vsyncadd [#allocation6], 0
      %s33 = sshll.u32 %s1, 4
      %s34 = int_to_ptr.hbm [resolvable:$true] %s33
      %s35 = sshll.u32 [#allocation5], 4
      %s36 = int_to_ptr.vmem [resolvable:$true] %s35
      %41 = dma.hbm_to_vmem [thread:$0]  %s34, 2048, %s36, [#allocation6], 128, 128, 8
    $region9: #{tpu_custom_call.1} parent=1 // pred_fallthru
      _
    // Predicated region
    $region10: #{tpu_custom_call.1} parent=1 // pred_check
      _
    $region11: #{tpu_custom_call.1} parent=1 // pred_check_branch
      %43 = sbr.rel (0) target = $region13
    $region12: #{tpu_custom_call.1} parent=1 // pred_region
      _
    $region13: #{tpu_custom_call.1} parent=1 // pred_fallthru
      _
    // Predicated region
    $region14: #{tpu_custom_call.1} parent=1 // pred_check
      _
    $region15: #{tpu_custom_call.1} parent=1 // pred_check_branch
      %45 = sbr.rel (0) target = $region17
    $region16: #{tpu_custom_call.1} parent=1 // pred_region
      %47 = vsyncadd [#allocation6], 0
      %s48 = sshll.u32 %s3, 4
      %s49 = int_to_ptr.hbm [resolvable:$true] %s48
      %s50 = sshll.u32 [#allocation7], 4
      %s51 = int_to_ptr.vmem [resolvable:$true] %s50
      %56 = dma.hbm_to_vmem [thread:$0]  %s49, 4096, %s51, [#allocation6], 256, 256, 16
    $region17: #{tpu_custom_call.1} parent=1 // pred_fallthru
      _
    // Predicated region
    $region18: #{tpu_custom_call.1} parent=1 // pred_check
      _
    $region19: #{tpu_custom_call.1} parent=1 // pred_check_branch
      %58 = sbr.rel (0) target = $region21
    $region20: #{tpu_custom_call.1} parent=1 // pred_region
      _
    $region21: #{tpu_custom_call.1} parent=1 // pred_fallthru
      _
    // Predicated region
    $region22: #{tpu_custom_call.1} parent=1 // pred_check
      _
    $region23: #{tpu_custom_call.1} parent=1 // pred_check_branch
      %60 = sbr.rel (0) target = $region25
    $region24: #{tpu_custom_call.1} parent=1 // pred_region
      %62 = vsyncadd [#allocation9], 0
      %s64 = sshll.u32 %s5, 4
      %s65 = int_to_ptr.hbm [resolvable:$true] %s64
      %s66 = sshll.u32 [#allocation8], 4
      %s67 = int_to_ptr.vmem [resolvable:$true] %s66
      %69 = dma.hbm_to_vmem [thread:$0]  %s65, 128, %s67, [#allocation9]
    $region25: #{tpu_custom_call.1} parent=1 // pred_fallthru
      _
    // Predicated region
    $region26: #{tpu_custom_call.1} parent=1 // pred_check
      _
    $region27: #{tpu_custom_call.1} parent=1 // pred_check_branch
      %71 = sbr.rel (0) target = $region29
    $region28: #{tpu_custom_call.1} parent=1 // pred_region
      %73 = dma.done [#allocation3], 128
    $region29: #{tpu_custom_call.1} parent=1 // pred_fallthru
      _
    // Predicated region
    $region30: #{tpu_custom_call.1} parent=1 // pred_check
      _
    $region31: #{tpu_custom_call.1} parent=1 // pred_check_branch
      %75 = sbr.rel (0) target = $region33
    $region32: #{tpu_custom_call.1} parent=1 // pred_region
      %77 = dma.done [#allocation6], 2048
    $region33: #{tpu_custom_call.1} parent=1 // pred_fallthru
      _
    // Predicated region
    $region34: #{tpu_custom_call.1} parent=1 // pred_check
      _
    $region35: #{tpu_custom_call.1} parent=1 // pred_check_branch
      %79 = sbr.rel (0) target = $region37
    $region36: #{tpu_custom_call.1} parent=1 // pred_region
      %81 = dma.done [#allocation6], 4096
    $region37: #{tpu_custom_call.1} parent=1 // pred_fallthru
      _
    // Predicated region
    $region38: #{tpu_custom_call.1} parent=1 // pred_check
      _
    $region39: #{tpu_custom_call.1} parent=1 // pred_check_branch
      %83 = sbr.rel (0) target = $region41
    $region40: #{tpu_custom_call.1} parent=1 // pred_region
      %85 = dma.done [#allocation9], 128
    $region41: #{tpu_custom_call.1} parent=1 // pred_fallthru
      _
    %v86 = vld [vmem:[#allocation2] sm:$0xff]
    %v87 = vld [vmem:[#allocation5] sm:$0xff]
    %v88 = vld [vmem:[#allocation5 + $0x8] sm:$0xff]
    %v89 = vld [vmem:[#allocation5 + $0x10] sm:$0xff]
    %v90 = vld [vmem:[#allocation5 + $0x18] sm:$0xff]
    %v91 = vld [vmem:[#allocation5 + $0x20] sm:$0xff]
    %v92 = vld [vmem:[#allocation5 + $0x28] sm:$0xff]
    %v93 = vld [vmem:[#allocation5 + $0x30] sm:$0xff]
    %v94 = vld [vmem:[#allocation5 + $0x38] sm:$0xff]
    %v95 = vld [vmem:[#allocation5 + $0x40] sm:$0xff]
    %v96 = vld [vmem:[#allocation5 + $0x48] sm:$0xff]
    %v97 = vld [vmem:[#allocation5 + $0x50] sm:$0xff]
    %v98 = vld [vmem:[#allocation5 + $0x58] sm:$0xff]
    %v99 = vld [vmem:[#allocation5 + $0x60] sm:$0xff]
    %v100 = vld [vmem:[#allocation5 + $0x68] sm:$0xff]
    %v101 = vld [vmem:[#allocation5 + $0x70] sm:$0xff]
    %v102 = vld [vmem:[#allocation5 + $0x78] sm:$0xff]
    %v103 = vld [vmem:[%s2] sm:$0x1]
    %v105 = vperm.slane %v103, 0
    %107 = vmatpush.msra.mxu0 %v102
    %108 = vmatpush.msra.mxu0 %v101
    %109 = vmatpush.msra.mxu0 %v100
    %110 = vmatpush.msra.mxu0 %v99
    %111 = vmatpush.msra.mxu0 %v98
    %112 = vmatpush.msra.mxu0 %v97
    %113 = vmatpush.msra.mxu0 %v96
    %114 = vmatpush.msra.mxu0 %v95
    %115 = vmatpush.msra.mxu0 %v94
    %116 = vmatpush.msra.mxu0 %v93
    %117 = vmatpush.msra.mxu0 %v92
    %118 = vmatpush.msra.mxu0 %v91
    %119 = vmatpush.msra.mxu0 %v90
    %120 = vmatpush.msra.mxu0 %v89
    %121 = vmatpush.msra.mxu0 %v88
    %122 = vmatpush.msra.mxu0 %v87
    %123 = vmatmul.f32.gmra.mxu0 %v86
    %v124 = vpop.f32.mrf.mxu0
    %v125 = vadd.f32 %v105, %v124
    %126 = vdwg.mxu0
    %v127 = vmax.f32 %v125, 0.0
    %v128 = vld [vmem:[#allocation7] sm:$0xff]
    %v129 = vld [vmem:[#allocation7 + $0x8] sm:$0xff]
    %v130 = vld [vmem:[#allocation7 + $0x10] sm:$0xff]
    %v131 = vld [vmem:[#allocation7 + $0x18] sm:$0xff]
    %v132 = vld [vmem:[#allocation7 + $0x20] sm:$0xff]
    %v133 = vld [vmem:[#allocation7 + $0x28] sm:$0xff]
    %v134 = vld [vmem:[#allocation7 + $0x30] sm:$0xff]
    %v135 = vld [vmem:[#allocation7 + $0x38] sm:$0xff]
    %v136 = vld [vmem:[#allocation7 + $0x40] sm:$0xff]
    %v137 = vld [vmem:[#allocation7 + $0x48] sm:$0xff]
    %v138 = vld [vmem:[#allocation7 + $0x50] sm:$0xff]
    %v139 = vld [vmem:[#allocation7 + $0x58] sm:$0xff]
    %v140 = vld [vmem:[#allocation7 + $0x60] sm:$0xff]
    %v141 = vld [vmem:[#allocation7 + $0x68] sm:$0xff]
    %v142 = vld [vmem:[#allocation7 + $0x70] sm:$0xff]
    %v143 = vld [vmem:[#allocation7 + $0x78] sm:$0xff]
    %v144 = vld [vmem:[#allocation7 + $0x80] sm:$0xff]
    %v145 = vld [vmem:[#allocation7 + $0x88] sm:$0xff]
    %v146 = vld [vmem:[#allocation7 + $0x90] sm:$0xff]
    %v147 = vld [vmem:[#allocation7 + $0x98] sm:$0xff]
    %v148 = vld [vmem:[#allocation7 + $0xa0] sm:$0xff]
    %v149 = vld [vmem:[#allocation7 + $0xa8] sm:$0xff]
    %v150 = vld [vmem:[#allocation7 + $0xb0] sm:$0xff]
    %v151 = vld [vmem:[#allocation7 + $0xb8] sm:$0xff]
    %v152 = vld [vmem:[#allocation7 + $0xc0] sm:$0xff]
    %v153 = vld [vmem:[#allocation7 + $0xc8] sm:$0xff]
    %v154 = vld [vmem:[#allocation7 + $0xd0] sm:$0xff]
    %v155 = vld [vmem:[#allocation7 + $0xd8] sm:$0xff]
    %v156 = vld [vmem:[#allocation7 + $0xe0] sm:$0xff]
    %v157 = vld [vmem:[#allocation7 + $0xe8] sm:$0xff]
    %v158 = vld [vmem:[#allocation7 + $0xf0] sm:$0xff]
    %v159 = vld [vmem:[#allocation7 + $0xf8] sm:$0xff]
    %v160 = vld [vmem:[%s4] sm:$0x3]
    %v161 = vld [vmem:[#allocation8] sm:$0xff]
    %v163 = vperm.slane %v160, 0
    %v164 = vperm.slane %v160, 1
    %167 = vmatpush.msra.mxu0 %v158
    %168 = vmatpush.msra.mxu0 %v156
    %169 = vmatpush.msra.mxu0 %v154
    %170 = vmatpush.msra.mxu0 %v152
    %171 = vmatpush.msra.mxu0 %v150
    %172 = vmatpush.msra.mxu0 %v148
    %173 = vmatpush.msra.mxu0 %v146
    %174 = vmatpush.msra.mxu0 %v144
    %175 = vmatpush.msra.mxu0 %v142
    %176 = vmatpush.msra.mxu0 %v140
    %177 = vmatpush.msra.mxu0 %v138
    %178 = vmatpush.msra.mxu0 %v136
    %179 = vmatpush.msra.mxu0 %v134
    %180 = vmatpush.msra.mxu0 %v132
    %181 = vmatpush.msra.mxu0 %v130
    %182 = vmatpush.msra.mxu0 %v128
    %183 = vmatmul.f32.gmra.mxu0 %v127
    %v184 = vpop.f32.mrf.mxu0
    %v185 = vadd.f32 %v163, %v184
    %186 = vdwg.mxu0
    %187 = vmatpush.msra.mxu0 %v159
    %188 = vmatpush.msra.mxu0 %v157
    %189 = vmatpush.msra.mxu0 %v155
    %190 = vmatpush.msra.mxu0 %v153
    %191 = vmatpush.msra.mxu0 %v151
    %192 = vmatpush.msra.mxu0 %v149
    %193 = vmatpush.msra.mxu0 %v147
    %194 = vmatpush.msra.mxu0 %v145
    %195 = vmatpush.msra.mxu0 %v143
    %196 = vmatpush.msra.mxu0 %v141
    %197 = vmatpush.msra.mxu0 %v139
    %198 = vmatpush.msra.mxu0 %v137
    %199 = vmatpush.msra.mxu0 %v135
    %200 = vmatpush.msra.mxu0 %v133
    %201 = vmatpush.msra.mxu0 %v131
    %202 = vmatpush.msra.mxu0 %v129
    %203 = vmatmul.f32.gmra.mxu0 %v127
    %v204 = vpop.f32.mrf.mxu0
    %v205 = vadd.f32 %v164, %v204
    %206 = vdwg.mxu0
    %v207 = vmax.f32 %v205, -20.0
    %v208 = vmin.f32 %v207, 2.0
    %v209 = vmul.f32 %v208, 1.442695
    %v210 = vpow.pop %v209
    %v211 = vmul.f32 %v161, %v210
    %v212 = vadd.f32 %v185, %v211
    %v213 = vtanh.pop %v212
    %214 = vst [vmem:[#allocation10] sm:$0xff] %v213
    %v215 = vmul.f32 %v161, -0.5
    %v216 = vmul.f32 %v215, %v161
    %v217 = vsub.f32 %v216, %v208
    %v218 = vsub.f32 %v217, 0.9189385
    %v219 = vmul.f32 %v212, -2.0
    %v220 = vmax.f32 %v219, 0.0
    %v221 = vand.u32 2147483647, %v219
    %v222 = vsub.f32 0.0, %v221
    %v223 = vmul.f32 %v222, 1.442695
    %v224 = vpow.pop %v223
    %v225 = vadd.f32 %v224, 1.0
    %v226 = vlog2.pop %v225
    %v227 = vmul.f32 %v226, 0.6931472
    %v228 = vmul.f32 -0.5, %v224
    %v229 = vadd.f32 %v228, 1.0
    %v230 = vmul.f32 %v229, %v224
    %v231 = vand.u32 2147483647, %v224
    %vm232 = vcmp.lt.f32.partialorder %v231, 0.0004427343
    %v233 = vsel %vm232, %v230, %v227
    %v234 = vadd.f32 %v220, %v233
    %v235 = vsub.f32 0.6931472, %v212
    %v236 = vsub.f32 %v235, %v234
    %v237 = vmul.f32 %v236, 2.0
    %v238 = vlaneseq
    %v239 = vand.u32 %v238, 127
    %vm240 = vcmp.lt.s32.totalorder %v239, 8
    %v241 = vsub.f32 %v218, %v237
    %v242 = vsel %vm240, %v241, 0.0
    %243 = vadd.xlane.f32.xlu0 %v242
    %v244 = vpop.xlane.xlu0 %243
    %245 = vst [vmem:[#allocation11] sm:$0xff] %v244
    // Predicated region
    $region42: #{tpu_custom_call.1} parent=1 // pred_check
      _
    $region43: #{tpu_custom_call.1} parent=1 // pred_check_branch
      %247 = sbr.rel (0) target = $region45
    $region44: #{tpu_custom_call.1} parent=1 // pred_region
      %249 = vsyncadd [#allocation4], 0
      %s251 = sshll.u32 [#allocation10], 4
      %s252 = int_to_ptr.vmem [resolvable:$true] %s251
      %s253 = sshll.u32 %s6, 4
      %s254 = int_to_ptr.hbm [resolvable:$true] %s253
      %256 = dma.vmem_to_hbm [thread:$0]  %s252, 128, %s254, [#allocation4]
    $region45: #{tpu_custom_call.1} parent=1 // pred_fallthru
      _
    // Predicated region
    $region46: #{tpu_custom_call.1} parent=1 // pred_check
      _
    $region47: #{tpu_custom_call.1} parent=1 // pred_check_branch
      %258 = sbr.rel (0) target = $region49
    $region48: #{tpu_custom_call.1} parent=1 // pred_region
      %260 = vsyncadd [#allocation12], 0
      %s262 = sshll.u32 [#allocation11], 4
      %s263 = int_to_ptr.vmem [resolvable:$true] %s262
      %s264 = sshll.u32 %s7, 4
      %s265 = int_to_ptr.hbm [resolvable:$true] %s264
      %267 = dma.vmem_to_hbm [thread:$0]  %s263, 128, %s265, [#allocation12]
    $region49: #{tpu_custom_call.1} parent=1 // pred_fallthru
      _
    // Predicated region
    $region50: #{tpu_custom_call.1} parent=1 // pred_check
      _
    $region51: #{tpu_custom_call.1} parent=1 // pred_check_branch
      %269 = sbr.rel (0) target = $region53
    $region52: #{tpu_custom_call.1} parent=1 // pred_region
      %271 = dma.done [#allocation4], 128
    $region53: #{tpu_custom_call.1} parent=1 // pred_fallthru
      _
    // Predicated region
    $region54: #{tpu_custom_call.1} parent=1 // pred_check
      _
    $region55: #{tpu_custom_call.1} parent=1 // pred_check_branch
      %273 = sbr.rel (0) target = $region57
    $region56: #{tpu_custom_call.1} parent=1 // pred_region
      %275 = dma.done [#allocation12], 128
    $region57: #{tpu_custom_call.1} parent=1 // pred_fallthru
      _
    %276 = vsyncpa [#allocation3], 1
    %277 = vsyncpa [#allocation6], 1
    %278 = vsyncpa [#allocation9], 1
    %279 = vsyncpa [#allocation4], 1
    %280 = vsyncpa [#allocation12], 1

</llo_original>
